<compile_context>
chip_gen: v7x
topology: tpu7x:2x2x1
jax: 0.10.0
libtpu: 0.0.40
codegen_flags: <defaults>
</compile_context>

<pallas_src>
import jax
import jax.numpy as jnp
from jax.experimental import pallas as pl
from jax.experimental.pallas import tpu as pltpu


def _round_up(x, m):
    return ((x + m - 1) // m) * m


def _leaky_relu(x, negative_slope=0.2):
    return jnp.where(x >= 0, x, negative_slope * x)


def encoder_kernel(x_ref,
                   w1_ref, b1_ref,
                   w2_ref, b2_ref,
                   w3_ref, b3_ref,
                   wh_ref, bh_ref,
                   out_ref):
    w_dtype = w1_ref.dtype

    # FC_input + LeakyReLU
    h = jnp.dot(x_ref[...].astype(w_dtype), w1_ref[...],
                preferred_element_type=jnp.float32) + b1_ref[...]
    h = _leaky_relu(h)

    # FC_input2 + LeakyReLU
    h = jnp.dot(h.astype(w_dtype), w2_ref[...],
                preferred_element_type=jnp.float32) + b2_ref[...]
    h = _leaky_relu(h)

    # FC_input3 + LeakyReLU
    h = jnp.dot(h.astype(w_dtype), w3_ref[...],
                preferred_element_type=jnp.float32) + b3_ref[...]
    h = _leaky_relu(h)

    # Fused heads: [mean | log_var] in one lane-dense matmul + store.
    out_ref[...] = (jnp.dot(h.astype(w_dtype), wh_ref[...],
                            preferred_element_type=jnp.float32)
                    + bh_ref[...]).astype(out_ref.dtype)


def encoder_forward(x, params, *, tile_b=256, param_dtype=jnp.float32):
    """x: [B, input_dim] f32.  params: PyTorch-convention weights ([out, in]) + biases."""
    B, input_dim = x.shape
    hidden_dim = params["w1"].shape[0]
    latent_dim = params["wm"].shape[0]
    lat2 = 2 * latent_dim

    # Lane-dense padded feature dims.
    in_p = _round_up(input_dim, 128)
    hid_p = _round_up(hidden_dim, 128)
    lat2_p = _round_up(lat2, 128)

    # Batch tile (sublane-aligned) and padded batch.
    tb = min(_round_up(tile_b, 8), _round_up(B, 8))
    Bp = _round_up(B, tb)

    def pad_w(w_t, rows, cols):  # w_t already [in, out]
        return jnp.pad(w_t, ((0, rows - w_t.shape[0]),
                             (0, cols - w_t.shape[1]))).astype(param_dtype)

    def pad_b(b, n):
        return jnp.pad(b, (0, n - b.shape[0])).reshape(1, n).astype(jnp.float32)

    w1 = pad_w(params["w1"].T, in_p, hid_p)
    w2 = pad_w(params["w2"].T, hid_p, hid_p)
    w3 = pad_w(params["w3"].T, hid_p, hid_p)
    wh = pad_w(jnp.concatenate([params["wm"].T, params["wv"].T], axis=1),
               hid_p, lat2_p)

    b1 = pad_b(params["b1"], hid_p)
    b2 = pad_b(params["b2"], hid_p)
    b3 = pad_b(params["b3"], hid_p)
    bh = pad_b(jnp.concatenate([params["bm"], params["bv"]]), lat2_p)

    x_p = jnp.pad(x.astype(jnp.float32),
                  ((0, Bp - B), (0, in_p - input_dim)))

    grid = (Bp // tb,)

    def row_spec(shape):            # tiled over batch
        return pl.BlockSpec(shape, lambda i: (i, 0))

    def resident_spec(shape):       # VMEM-resident across grid steps
        return pl.BlockSpec(shape, lambda i: (0, 0))

    # VMEM budget: resident weights/biases + double-buffered x/out tiles +
    # activation temporaries, with ~1.5x headroom, capped well below physical VMEM.
    weight_bytes = sum(int(w.size) * w.dtype.itemsize for w in (w1, w2, w3, wh))
    bias_bytes = sum(int(b.size) * 4 for b in (b1, b2, b3, bh))
    io_bytes = 2 * 2 * (tb * in_p + tb * lat2_p) * 4   # double-buffered in/out
    act_bytes = 4 * tb * hid_p * 4
    vmem_limit = int(min(max(1.5 * (weight_bytes + bias_bytes + io_bytes + act_bytes),
                             4 << 20), 48 << 20))

    flops = int(2 * Bp * (in_p * hid_p + 2 * hid_p * hid_p + hid_p * lat2_p))
    bytes_accessed = int(x_p.size * 4 + weight_bytes + bias_bytes + Bp * lat2_p * 4)

    out = pl.pallas_call(
        encoder_kernel,
        out_shape=jax.ShapeDtypeStruct((Bp, lat2_p), jnp.float32),
        grid=grid,
        in_specs=[
            row_spec((tb, in_p)),
            resident_spec(w1.shape), resident_spec(b1.shape),
            resident_spec(w2.shape), resident_spec(b2.shape),
            resident_spec(w3.shape), resident_spec(b3.shape),
            resident_spec(wh.shape), resident_spec(bh.shape),
        ],
        out_specs=row_spec((tb, lat2_p)),
        compiler_params=pltpu.CompilerParams(
            dimension_semantics=("parallel",),
            vmem_limit_bytes=vmem_limit,
        ),
        cost_estimate=pl.CostEstimate(
            flops=flops, transcendentals=0, bytes_accessed=bytes_accessed),
    )(x_p, w1, b1, w2, b2, w3, b3, wh, bh)

    mean = out[:B, :latent_dim]
    log_var = out[:B, latent_dim:lat2]
    return mean, log_var


def init_params(key, input_dim, hidden_dim, latent_dim):
    """Deterministic synthetic parameters (PyTorch convention: weight [out, in])."""
    keys = jax.random.split(key, 10)

    def lin(kw, kb, out_d, in_d):
        bound = 1.0 / jnp.sqrt(in_d)
        w = jax.random.uniform(kw, (out_d, in_d), jnp.float32, -bound, bound)
        b = jax.random.uniform(kb, (out_d,), jnp.float32, -bound, bound)
        return w, b

    w1, b1 = lin(keys[0], keys[1], hidden_dim, input_dim)
    w2, b2 = lin(keys[2], keys[3], hidden_dim, hidden_dim)
    w3, b3 = lin(keys[4], keys[5], hidden_dim, hidden_dim)
    wm, bm = lin(keys[6], keys[7], latent_dim, hidden_dim)
    wv, bv = lin(keys[8], keys[9], latent_dim, hidden_dim)
    return dict(w1=w1, b1=b1, w2=w2, b2=b2, w3=w3, b3=b3,
                wm=wm, bm=bm, wv=wv, bv=bv)


def encoder_reference(x, p):
    """Pure-JAX reference matching the PyTorch forward."""
    lrelu = lambda v: jnp.where(v >= 0, v, 0.2 * v)
    h = lrelu(x @ p["w1"].T + p["b1"])
    h = lrelu(h @ p["w2"].T + p["b2"])
    h = lrelu(h @ p["w3"].T + p["b3"])
    mean = h @ p["wm"].T + p["bm"]
    log_var = h @ p["wv"].T + p["bv"]
    return mean, log_var


if __name__ == "__main__":
    # Small shapes; B=13 (non-multiple of the tile) and tile_b=8 exercise both
    # batch padding and a multi-step (pipelined) grid.
    B, input_dim, hidden_dim, latent_dim = 13, 64, 32, 16

    key = jax.random.PRNGKey(0)
    kx, kp = jax.random.split(key)
    x = jax.random.normal(kx, (B, input_dim), jnp.float32)
    params = init_params(kp, input_dim, hidden_dim, latent_dim)

    mean, log_var = encoder_forward(x, params, tile_b=8)
    jax.block_until_ready((mean, log_var))

    mean_ref, log_var_ref = encoder_reference(x, params)
    assert mean.shape == mean_ref.shape and log_var.shape == log_var_ref.shape
    assert jnp.allclose(mean, mean_ref, atol=1e-5, rtol=1e-5)
    assert jnp.allclose(log_var, log_var_ref, atol=1e-5, rtol=1e-5)

    print("KERNEL_OK")
</pallas_src>

<mosaic_0001>
module attributes {stable_mosaic.version = 11 : i64} {
  func.func @encoder_kernel(%arg0: i32, %arg1: memref<8x128xf32, #tpu.memory_space<vmem>>, %arg2: memref<128x128xf32, #tpu.memory_space<vmem>>, %arg3: memref<1x128xf32, #tpu.memory_space<vmem>>, %arg4: memref<128x128xf32, #tpu.memory_space<vmem>>, %arg5: memref<1x128xf32, #tpu.memory_space<vmem>>, %arg6: memref<128x128xf32, #tpu.memory_space<vmem>>, %arg7: memref<1x128xf32, #tpu.memory_space<vmem>>, %arg8: memref<128x128xf32, #tpu.memory_space<vmem>>, %arg9: memref<1x128xf32, #tpu.memory_space<vmem>>, %arg10: memref<8x128xf32, #tpu.memory_space<vmem>>) attributes {dimension_semantics = [#tpu.dimension_semantics<parallel>], iteration_bounds = array<i64: 2>, scalar_prefetch = 0 : i64, scratch_operands = 0 : i64, tpu.core_type = #tpu.core_type<tc>, window_params = [{transform_indices = @transform_0, window_bounds = array<i64: 8, 128>}, {pipeline_mode = #tpu.pipeline_mode<synchronous>, transform_indices = @transform_1, window_bounds = array<i64: 128, 128>}, {pipeline_mode = #tpu.pipeline_mode<synchronous>, transform_indices = @transform_2, window_bounds = array<i64: 1, 128>}, {pipeline_mode = #tpu.pipeline_mode<synchronous>, transform_indices = @transform_3, window_bounds = array<i64: 128, 128>}, {pipeline_mode = #tpu.pipeline_mode<synchronous>, transform_indices = @transform_4, window_bounds = array<i64: 1, 128>}, {pipeline_mode = #tpu.pipeline_mode<synchronous>, transform_indices = @transform_5, window_bounds = array<i64: 128, 128>}, {pipeline_mode = #tpu.pipeline_mode<synchronous>, transform_indices = @transform_6, window_bounds = array<i64: 1, 128>}, {pipeline_mode = #tpu.pipeline_mode<synchronous>, transform_indices = @transform_7, window_bounds = array<i64: 128, 128>}, {pipeline_mode = #tpu.pipeline_mode<synchronous>, transform_indices = @transform_8, window_bounds = array<i64: 1, 128>}, {transform_indices = @transform_9, window_bounds = array<i64: 8, 128>}]} {
    %c0 = arith.constant 0 : index
    %c0_0 = arith.constant 0 : index
    %0 = vector.load %arg1[%c0, %c0_0] : memref<8x128xf32, #tpu.memory_space<vmem>>, vector<8x128xf32>
    %c0_1 = arith.constant 0 : index
    %c0_2 = arith.constant 0 : index
    %1 = vector.load %arg2[%c0_1, %c0_2] : memref<128x128xf32, #tpu.memory_space<vmem>>, vector<128x128xf32>
    %cst = arith.constant dense<0.000000e+00> : vector<8x128xf32>
    %2 = tpu.matmul %0, %1, %cst {dimension_numbers = #tpu.dot_dimension_numbers<[1], [0], [0], [1], [0, 0, 1, 1], [], []>} : vector<8x128xf32>, vector<128x128xf32>, vector<8x128xf32> -> vector<8x128xf32>
    %c0_3 = arith.constant 0 : index
    %c0_4 = arith.constant 0 : index
    %3 = vector.load %arg3[%c0_3, %c0_4] : memref<1x128xf32, #tpu.memory_space<vmem>>, vector<1x128xf32>
    %4 = vector.broadcast %3 : vector<1x128xf32> to vector<8x128xf32>
    %5 = arith.addf %2, %4 : vector<8x128xf32>
    %cst_5 = arith.constant 0.000000e+00 : f32
    %6 = vector.broadcast %cst_5 : f32 to vector<8x128xf32>
    %7 = arith.cmpf oge, %5, %6 : vector<8x128xf32>
    %cst_6 = arith.constant 2.000000e-01 : f32
    %8 = vector.broadcast %cst_6 : f32 to vector<8x128xf32>
    %9 = arith.mulf %8, %5 : vector<8x128xf32>
    %10 = arith.select %7, %5, %9 : vector<8x128xi1>, vector<8x128xf32>
    %c0_7 = arith.constant 0 : index
    %c0_8 = arith.constant 0 : index
    %11 = vector.load %arg4[%c0_7, %c0_8] : memref<128x128xf32, #tpu.memory_space<vmem>>, vector<128x128xf32>
    %cst_9 = arith.constant dense<0.000000e+00> : vector<8x128xf32>
    %12 = tpu.matmul %10, %11, %cst_9 {dimension_numbers = #tpu.dot_dimension_numbers<[1], [0], [0], [1], [0, 0, 1, 1], [], []>} : vector<8x128xf32>, vector<128x128xf32>, vector<8x128xf32> -> vector<8x128xf32>
    %c0_10 = arith.constant 0 : index
    %c0_11 = arith.constant 0 : index
    %13 = vector.load %arg5[%c0_10, %c0_11] : memref<1x128xf32, #tpu.memory_space<vmem>>, vector<1x128xf32>
    %14 = vector.broadcast %13 : vector<1x128xf32> to vector<8x128xf32>
    %15 = arith.addf %12, %14 : vector<8x128xf32>
    %cst_12 = arith.constant 0.000000e+00 : f32
    %16 = vector.broadcast %cst_12 : f32 to vector<8x128xf32>
    %17 = arith.cmpf oge, %15, %16 : vector<8x128xf32>
    %cst_13 = arith.constant 2.000000e-01 : f32
    %18 = vector.broadcast %cst_13 : f32 to vector<8x128xf32>
    %19 = arith.mulf %18, %15 : vector<8x128xf32>
    %20 = arith.select %17, %15, %19 : vector<8x128xi1>, vector<8x128xf32>
    %c0_14 = arith.constant 0 : index
    %c0_15 = arith.constant 0 : index
    %21 = vector.load %arg6[%c0_14, %c0_15] : memref<128x128xf32, #tpu.memory_space<vmem>>, vector<128x128xf32>
    %cst_16 = arith.constant dense<0.000000e+00> : vector<8x128xf32>
    %22 = tpu.matmul %20, %21, %cst_16 {dimension_numbers = #tpu.dot_dimension_numbers<[1], [0], [0], [1], [0, 0, 1, 1], [], []>} : vector<8x128xf32>, vector<128x128xf32>, vector<8x128xf32> -> vector<8x128xf32>
    %c0_17 = arith.constant 0 : index
    %c0_18 = arith.constant 0 : index
    %23 = vector.load %arg7[%c0_17, %c0_18] : memref<1x128xf32, #tpu.memory_space<vmem>>, vector<1x128xf32>
    %24 = vector.broadcast %23 : vector<1x128xf32> to vector<8x128xf32>
    %25 = arith.addf %22, %24 : vector<8x128xf32>
    %cst_19 = arith.constant 0.000000e+00 : f32
    %26 = vector.broadcast %cst_19 : f32 to vector<8x128xf32>
    %27 = arith.cmpf oge, %25, %26 : vector<8x128xf32>
    %cst_20 = arith.constant 2.000000e-01 : f32
    %28 = vector.broadcast %cst_20 : f32 to vector<8x128xf32>
    %29 = arith.mulf %28, %25 : vector<8x128xf32>
    %30 = arith.select %27, %25, %29 : vector<8x128xi1>, vector<8x128xf32>
    %c0_21 = arith.constant 0 : index
    %c0_22 = arith.constant 0 : index
    %31 = vector.load %arg8[%c0_21, %c0_22] : memref<128x128xf32, #tpu.memory_space<vmem>>, vector<128x128xf32>
    %cst_23 = arith.constant dense<0.000000e+00> : vector<8x128xf32>
    %32 = tpu.matmul %30, %31, %cst_23 {dimension_numbers = #tpu.dot_dimension_numbers<[1], [0], [0], [1], [0, 0, 1, 1], [], []>} : vector<8x128xf32>, vector<128x128xf32>, vector<8x128xf32> -> vector<8x128xf32>
    %c0_24 = arith.constant 0 : index
    %c0_25 = arith.constant 0 : index
    %33 = vector.load %arg9[%c0_24, %c0_25] : memref<1x128xf32, #tpu.memory_space<vmem>>, vector<1x128xf32>
    %34 = vector.broadcast %33 : vector<1x128xf32> to vector<8x128xf32>
    %35 = arith.addf %32, %34 : vector<8x128xf32>
    %c0_26 = arith.constant 0 : index
    %c0_27 = arith.constant 0 : index
    %36 = vector.load %arg10[%c0_26, %c0_27] : memref<8x128xf32, #tpu.memory_space<vmem>>, vector<8x128xf32>
    tpu.vector_store %arg10[%c0_26, %c0_27], %35 {strides = array<i32>} : memref<8x128xf32, #tpu.memory_space<vmem>>, vector<8x128xf32>,
    return
  }
  func.func @transform_0(%arg0: i32) -> (i32, i32) {
    %c0_i32 = arith.constant 0 : i32
    %c0_i32_0 = arith.constant 0 : i32
    return %arg0, %c0_i32 : i32, i32
  }
  func.func @transform_1(%arg0: i32) -> (i32, i32) {
    %c0_i32 = arith.constant 0 : i32
    %c0_i32_0 = arith.constant 0 : i32
    %c0_i32_1 = arith.constant 0 : i32
    return %c0_i32, %c0_i32_0 : i32, i32
  }
  func.func @transform_2(%arg0: i32) -> (i32, i32) {
    %c0_i32 = arith.constant 0 : i32
    %c0_i32_0 = arith.constant 0 : i32
    %c0_i32_1 = arith.constant 0 : i32
    return %c0_i32, %c0_i32_0 : i32, i32
  }
  func.func @transform_3(%arg0: i32) -> (i32, i32) {
    %c0_i32 = arith.constant 0 : i32
    %c0_i32_0 = arith.constant 0 : i32
    %c0_i32_1 = arith.constant 0 : i32
    return %c0_i32, %c0_i32_0 : i32, i32
  }
  func.func @transform_4(%arg0: i32) -> (i32, i32) {
    %c0_i32 = arith.constant 0 : i32
    %c0_i32_0 = arith.constant 0 : i32
    %c0_i32_1 = arith.constant 0 : i32
    return %c0_i32, %c0_i32_0 : i32, i32
  }
  func.func @transform_5(%arg0: i32) -> (i32, i32) {
    %c0_i32 = arith.constant 0 : i32
    %c0_i32_0 = arith.constant 0 : i32
    %c0_i32_1 = arith.constant 0 : i32
    return %c0_i32, %c0_i32_0 : i32, i32
  }
  func.func @transform_6(%arg0: i32) -> (i32, i32) {
    %c0_i32 = arith.constant 0 : i32
    %c0_i32_0 = arith.constant 0 : i32
    %c0_i32_1 = arith.constant 0 : i32
    return %c0_i32, %c0_i32_0 : i32, i32
  }
  func.func @transform_7(%arg0: i32) -> (i32, i32) {
    %c0_i32 = arith.constant 0 : i32
    %c0_i32_0 = arith.constant 0 : i32
    %c0_i32_1 = arith.constant 0 : i32
    return %c0_i32, %c0_i32_0 : i32, i32
  }
  func.func @transform_8(%arg0: i32) -> (i32, i32) {
    %c0_i32 = arith.constant 0 : i32
    %c0_i32_0 = arith.constant 0 : i32
    %c0_i32_1 = arith.constant 0 : i32
    return %c0_i32, %c0_i32_0 : i32, i32
  }
  func.func @transform_9(%arg0: i32) -> (i32, i32) {
    %c0_i32 = arith.constant 0 : i32
    %c0_i32_0 = arith.constant 0 : i32
    return %arg0, %c0_i32 : i32, i32
  }
}

</mosaic_0001>

<llo_original>
// kernel: tpu_custom_call.1
$region0: #{tpu_custom_call.1}
  #allocation0 [shape = 'u32[]', space=smem, size = 0x4, offset = 0x4, fixed_abs, tag = 'smem constant byte address 0x4 - core index']
  #allocation1 [shape = 'u32[144,128]{1,0:T(1,128)}', space=vmem, size = 0x12000, scoped, tag = 'internal scratch']
  %s0 = inlined_call_operand.hbm [shape: f32[16,128], index: 0, kind: input, shape index: {}]
  %s1 = inlined_call_operand.hbm [shape: f32[128,128], index: 1, kind: input, shape index: {}]
  %s2 = inlined_call_operand.vmem [shape: f32[1,128], index: 2, kind: input, shape index: {}]
  %s3 = inlined_call_operand.hbm [shape: f32[128,128], index: 3, kind: input, shape index: {}]
  %s4 = inlined_call_operand.vmem [shape: f32[1,128], index: 4, kind: input, shape index: {}]
  %s5 = inlined_call_operand.hbm [shape: f32[128,128], index: 5, kind: input, shape index: {}]
  %s6 = inlined_call_operand.vmem [shape: f32[1,128], index: 6, kind: input, shape index: {}]
  %s7 = inlined_call_operand.hbm [shape: f32[128,128], index: 7, kind: input, shape index: {}]
  %s8 = inlined_call_operand.vmem [shape: f32[1,128], index: 8, kind: input, shape index: {}]
  %s9 = inlined_call_operand.hbm [shape: f32[16,128], index: 9, kind: output, shape index: {}]
  %s10 = sld [smem:[#allocation0]]
  $region89: #{tpu_custom_call.1} parent=0
    _
  %s12 = ssub.s32 1, %s10
  %s13 = scalar_select 0, %s12, %s10
  $region1: #{tpu_custom_call.1} parent=0
    #allocation2 [shape = 'u8[8192]{0}', space=vmem, size = 0x2000, scoped, tag = 'input window, operand 0']
    #allocation3 [shape = 's32[2]{0}', space=sflag, size = 0x8, scoped, tag = 'scoped memory for tpu_custom_call.1']
    #allocation4 [shape = 's32[2]{0}', space=sflag, size = 0x8, scoped, tag = 'scoped memory for tpu_custom_call.1']
    #allocation5 [shape = 'u8[65536]{0}', space=vmem, size = 0x10000, scoped, tag = 'input window, operand 1, single buffered']
    #allocation6 [shape = 's32[1]{0}', space=sflag, size = 0x4, scoped, tag = 'scoped memory for tpu_custom_call.1']
    #allocation7 [shape = 'u8[65536]{0}', space=vmem, size = 0x10000, scoped, tag = 'input window, operand 3, single buffered']
    #allocation8 [shape = 'u8[65536]{0}', space=vmem, size = 0x10000, scoped, tag = 'input window, operand 5, single buffered']
    #allocation9 [shape = 's32[1]{0}', space=sflag, size = 0x4, scoped, tag = 'scoped memory for tpu_custom_call.1']
    #allocation10 [shape = 'u8[65536]{0}', space=vmem, size = 0x10000, scoped, tag = 'input window, operand 7, single buffered']
    #allocation11 [shape = 'u8[8192]{0}', space=vmem, size = 0x2000, scoped, tag = 'output window, operand 0']
    %14 = vsyncpa [#allocation3], 0
    %s15 = scalar_lea.sflag [#allocation3], 1
    %16 = vsyncpa %s15, 0
    %17 = vsyncpa [#allocation6], 0
    %18 = vsyncpa [#allocation9], 0
    %19 = vsyncpa [#allocation4], 0
    %s20 = scalar_lea.sflag [#allocation4], 1
    %21 = vsyncpa %s20, 0
    loop: start=0, step=1, limit=4
    $region2: #{tpu_custom_call.1} parent=1 // loop_pre_header
      _
    $region3: #{tpu_custom_call.1} parent=1 // loop_header
      %s23 = sphi 0, %s27
      %p24 = scmp.ge.s32.totalorder %s23, 4
      %s33 = sphi 0, %s35
      %s36 = sphi 0, %s33
      %s37 = sphi 0, %s36
      %s53 = sphi 0, %s37
      %s57 = sphi 0, %s57
      %s59 = sphi 0, %s57
      %s60 = sphi 0, %s59
      %s74 = sphi 0, %s60
      %s78 = sphi 0, %s78
      %s80 = sphi 0, %s78
      %s81 = sphi 0, %s80
      %s95 = sphi 0, %s81
      %s99 = sphi 0, %s99
      %s101 = sphi 0, %s99
      %s102 = sphi 0, %s101
      %s116 = sphi 0, %s102
      %s120 = sphi 0, %s120
      %s122 = sphi 0, %s120
      %s123 = sphi 0, %s122
      %s137 = sphi 0, %s123
      %s141 = sphi 0, %s141
      %s143 = sphi 0, %s141
      %s144 = sphi 0, %s143
      %s158 = sphi 0, %s144
      %s162 = sphi 0, %s162
      %s164 = sphi 0, %s162
      %s165 = sphi 0, %s164
      %s179 = sphi 0, %s165
      %s183 = sphi 0, %s183
      %s185 = sphi 0, %s183
      %s186 = sphi 0, %s185
      %s200 = sphi 0, %s186
      %s204 = sphi 0, %s204
      %s206 = sphi 0, %s204
      %s207 = sphi 0, %s206
      %s221 = sphi 0, %s207
      %s227 = sphi 0, %s229
      %s230 = sphi 0, %s227
      %s231 = sphi 0, %s230
      %s247 = sphi 0, %s231
    $region4: #{tpu_custom_call.1} parent=1 // loop_header_branch
      %26 = sbr.rel (%p24) target = $region8
    $region5: #{tpu_custom_call.1} parent=1 // loop_body
      %s28 = ssub.s32 %s23, 1
      %s29 = ssub.s32 %s23, 2
      %s30 = sadd.s32 %s23, 1
      %s31 = ssub.s32 %s23, %s30
      %p32 = scmp.eq.s32.totalorder %s31, 0
      %s34 = sadd.s32 %s33, 1
      %s35 = scalar_select %p32, %s33, %s34
      %p38 = pneg %p32
      %p39 = scmp.eq.s32.totalorder %s23, 1
      %p40 = por %p38, %p39
      %p41 = scmp.ne.s32.totalorder %s33, %s36
      %p42 = scmp.eq.s32.totalorder %s23, 0
      %p43 = por %p41, %p42
      %p44 = scmp.ne.s32.totalorder %s33, %s36
      %p45 = scmp.eq.s32.totalorder %s28, 1
      %p46 = por %p44, %p45
      %p47 = scmp.ne.s32.totalorder %s36, %s37
      %p48 = scmp.eq.s32.totalorder %s28, 0
      %p49 = por %p47, %p48
      %p50 = scmp.ne.s32.totalorder %s36, %s37
      %p51 = scmp.eq.s32.totalorder %s29, 1
      %p52 = por %p50, %p51
      %p54 = scmp.ne.s32.totalorder %s37, %s53
      %p55 = scmp.eq.s32.totalorder %s29, 0
      %p56 = por %p54, %p55
      %s58 = sadd.s32 %s57, 1
      %p61 = scmp.eq.s32.totalorder %s23, 1
      %p62 = scmp.ne.s32.totalorder %s57, %s59
      %p63 = scmp.eq.s32.totalorder %s23, 0
      %p64 = por %p62, %p63
      %p65 = scmp.ne.s32.totalorder %s57, %s59
      %p66 = scmp.eq.s32.totalorder %s28, 1
      %p67 = por %p65, %p66
      %p68 = scmp.ne.s32.totalorder %s59, %s60
      %p69 = scmp.eq.s32.totalorder %s28, 0
      %p70 = por %p68, %p69
      %p71 = scmp.ne.s32.totalorder %s59, %s60
      %p72 = scmp.eq.s32.totalorder %s29, 1
      %p73 = por %p71, %p72
      %p75 = scmp.ne.s32.totalorder %s60, %s74
      %p76 = scmp.eq.s32.totalorder %s29, 0
      %p77 = por %p75, %p76
      %s79 = sadd.s32 %s78, 1
      %p82 = scmp.eq.s32.totalorder %s23, 1
      %p83 = scmp.ne.s32.totalorder %s78, %s80
      %p84 = scmp.eq.s32.totalorder %s23, 0
      %p85 = por %p83, %p84
      %p86 = scmp.ne.s32.totalorder %s78, %s80
      %p87 = scmp.eq.s32.totalorder %s28, 1
      %p88 = por %p86, %p87
      %p89 = scmp.ne.s32.totalorder %s80, %s81
      %p90 = scmp.eq.s32.totalorder %s28, 0
      %p91 = por %p89, %p90
      %p92 = scmp.ne.s32.totalorder %s80, %s81
      %p93 = scmp.eq.s32.totalorder %s29, 1
      %p94 = por %p92, %p93
      %p96 = scmp.ne.s32.totalorder %s81, %s95
      %p97 = scmp.eq.s32.totalorder %s29, 0
      %p98 = por %p96, %p97
      %s100 = sadd.s32 %s99, 1
      %p103 = scmp.eq.s32.totalorder %s23, 1
      %p104 = scmp.ne.s32.totalorder %s99, %s101
      %p105 = scmp.eq.s32.totalorder %s23, 0
      %p106 = por %p104, %p105
      %p107 = scmp.ne.s32.totalorder %s99, %s101
      %p108 = scmp.eq.s32.totalorder %s28, 1
      %p109 = por %p107, %p108
      %p110 = scmp.ne.s32.totalorder %s101, %s102
      %p111 = scmp.eq.s32.totalorder %s28, 0
      %p112 = por %p110, %p111
      %p113 = scmp.ne.s32.totalorder %s101, %s102
      %p114 = scmp.eq.s32.totalorder %s29, 1
      %p115 = por %p113, %p114
      %p117 = scmp.ne.s32.totalorder %s102, %s116
      %p118 = scmp.eq.s32.totalorder %s29, 0
      %p119 = por %p117, %p118
      %s121 = sadd.s32 %s120, 1
      %p124 = scmp.eq.s32.totalorder %s23, 1
      %p125 = scmp.ne.s32.totalorder %s120, %s122
      %p126 = scmp.eq.s32.totalorder %s23, 0
      %p127 = por %p125, %p126
      %p128 = scmp.ne.s32.totalorder %s120, %s122
      %p129 = scmp.eq.s32.totalorder %s28, 1
      %p130 = por %p128, %p129
      %p131 = scmp.ne.s32.totalorder %s122, %s123
      %p132 = scmp.eq.s32.totalorder %s28, 0
      %p133 = por %p131, %p132
      %p134 = scmp.ne.s32.totalorder %s122, %s123
      %p135 = scmp.eq.s32.totalorder %s29, 1
      %p136 = por %p134, %p135
      %p138 = scmp.ne.s32.totalorder %s123, %s137
      %p139 = scmp.eq.s32.totalorder %s29, 0
      %p140 = por %p138, %p139
      %s142 = sadd.s32 %s141, 1
      %p145 = scmp.eq.s32.totalorder %s23, 1
      %p146 = scmp.ne.s32.totalorder %s141, %s143
      %p147 = scmp.eq.s32.totalorder %s23, 0
      %p148 = por %p146, %p147
      %p149 = scmp.ne.s32.totalorder %s141, %s143
      %p150 = scmp.eq.s32.totalorder %s28, 1
      %p151 = por %p149, %p150
      %p152 = scmp.ne.s32.totalorder %s143, %s144
      %p153 = scmp.eq.s32.totalorder %s28, 0
      %p154 = por %p152, %p153
      %p155 = scmp.ne.s32.totalorder %s143, %s144
      %p156 = scmp.eq.s32.totalorder %s29, 1
      %p157 = por %p155, %p156
      %p159 = scmp.ne.s32.totalorder %s144, %s158
      %p160 = scmp.eq.s32.totalorder %s29, 0
      %p161 = por %p159, %p160
      %s163 = sadd.s32 %s162, 1
      %p166 = scmp.eq.s32.totalorder %s23, 1
      %p167 = scmp.ne.s32.totalorder %s162, %s164
      %p168 = scmp.eq.s32.totalorder %s23, 0
      %p169 = por %p167, %p168
      %p170 = scmp.ne.s32.totalorder %s162, %s164
      %p171 = scmp.eq.s32.totalorder %s28, 1
      %p172 = por %p170, %p171
      %p173 = scmp.ne.s32.totalorder %s164, %s165
      %p174 = scmp.eq.s32.totalorder %s28, 0
      %p175 = por %p173, %p174
      %p176 = scmp.ne.s32.totalorder %s164, %s165
      %p177 = scmp.eq.s32.totalorder %s29, 1
      %p178 = por %p176, %p177
      %p180 = scmp.ne.s32.totalorder %s165, %s179
      %p181 = scmp.eq.s32.totalorder %s29, 0
      %p182 = por %p180, %p181
      %s184 = sadd.s32 %s183, 1
      %p187 = scmp.eq.s32.totalorder %s23, 1
      %p188 = scmp.ne.s32.totalorder %s183, %s185
      %p189 = scmp.eq.s32.totalorder %s23, 0
      %p190 = por %p188, %p189
      %p191 = scmp.ne.s32.totalorder %s183, %s185
      %p192 = scmp.eq.s32.totalorder %s28, 1
      %p193 = por %p191, %p192
      %p194 = scmp.ne.s32.totalorder %s185, %s186
      %p195 = scmp.eq.s32.totalorder %s28, 0
      %p196 = por %p194, %p195
      %p197 = scmp.ne.s32.totalorder %s185, %s186
      %p198 = scmp.eq.s32.totalorder %s29, 1
      %p199 = por %p197, %p198
      %p201 = scmp.ne.s32.totalorder %s186, %s200
      %p202 = scmp.eq.s32.totalorder %s29, 0
      %p203 = por %p201, %p202
      %s205 = sadd.s32 %s204, 1
      %p208 = scmp.eq.s32.totalorder %s23, 1
      %p209 = scmp.ne.s32.totalorder %s204, %s206
      %p210 = scmp.eq.s32.totalorder %s23, 0
      %p211 = por %p209, %p210
      %p212 = scmp.ne.s32.totalorder %s204, %s206
      %p213 = scmp.eq.s32.totalorder %s28, 1
      %p214 = por %p212, %p213
      %p215 = scmp.ne.s32.totalorder %s206, %s207
      %p216 = scmp.eq.s32.totalorder %s28, 0
      %p217 = por %p215, %p216
      %p218 = scmp.ne.s32.totalorder %s206, %s207
      %p219 = scmp.eq.s32.totalorder %s29, 1
      %p220 = por %p218, %p219
      %p222 = scmp.ne.s32.totalorder %s207, %s221
      %p223 = scmp.eq.s32.totalorder %s29, 0
      %p224 = por %p222, %p223
      %s225 = ssub.s32 %s23, %s30
      %p226 = scmp.eq.s32.totalorder %s225, 0
      %s228 = sadd.s32 %s227, 1
      %s229 = scalar_select %p226, %s227, %s228
      %p232 = pneg %p226
      %p233 = scmp.eq.s32.totalorder %s23, 1
      %p234 = por %p232, %p233
      %p235 = scmp.ne.s32.totalorder %s227, %s230
      %p236 = scmp.eq.s32.totalorder %s23, 0
      %p237 = por %p235, %p236
      %p238 = scmp.ne.s32.totalorder %s227, %s230
      %p239 = scmp.eq.s32.totalorder %s28, 1
      %p240 = por %p238, %p239
      %p241 = scmp.ne.s32.totalorder %s230, %s231
      %p242 = scmp.eq.s32.totalorder %s28, 0
      %p243 = por %p241, %p242
      %p244 = scmp.ne.s32.totalorder %s230, %s231
      %p245 = scmp.eq.s32.totalorder %s29, 1
      %p246 = por %p244, %p245
      %p248 = scmp.ne.s32.totalorder %s231, %s247
      %p249 = scmp.eq.s32.totalorder %s29, 0
      %p250 = por %p248, %p249
      %p251 = scmp.le.s32.totalorder 1, %s23
      %p252 = scmp.lt.s32.totalorder %s23, 3
      %p253 = pnand %p251, %p252
      %p254 = pneg %p253
      // Predicated region
      $region9: #{tpu_custom_call.1} parent=5 // pred_check
        _
      $region10: #{tpu_custom_call.1} parent=5 // pred_check_branch
        %256 = sbr.rel (%p253) target = $region12
      $region11: #{tpu_custom_call.1} parent=5 // pred_region
        %s257 = ssub.s32 %s23, 1
        // Predicated region
        $region13: #{tpu_custom_call.1} parent=11 // pred_check
          %p258 = pneg %p70
        $region14: #{tpu_custom_call.1} parent=11 // pred_check_branch
          %260 = sbr.rel (%p258) target = $region16
        $region15: #{tpu_custom_call.1} parent=11 // pred_region
          %s262 = ssub.s32 2048, 2048
          %263 = vsyncadd [#allocation6], %s262
          %s264 = sshll.u32 [#allocation5], 4
          %s265 = int_to_ptr.vmem [resolvable:$true] %s264
          %270 = dma.hbm_to_vmem [thread:$0]  %s1, 2048, %s265, [#allocation6], 128, 128, 8
        $region16: #{tpu_custom_call.1} parent=11 // pred_fallthru
          _
        // Predicated region
        $region17: #{tpu_custom_call.1} parent=11 // pred_check
          %p271 = pneg %p91
        $region18: #{tpu_custom_call.1} parent=11 // pred_check_branch
          %273 = sbr.rel (%p271) target = $region20
        $region19: #{tpu_custom_call.1} parent=11 // pred_region
          _
        $region20: #{tpu_custom_call.1} parent=11 // pred_fallthru
          _
        // Predicated region
        $region21: #{tpu_custom_call.1} parent=11 // pred_check
          %p274 = pneg %p112
        $region22: #{tpu_custom_call.1} parent=11 // pred_check_branch
          %276 = sbr.rel (%p274) target = $region24
        $region23: #{tpu_custom_call.1} parent=11 // pred_region
          %s278 = ssub.s32 2048, 2048
          %279 = vsyncadd [#allocation6], %s278
          %s280 = sshll.u32 [#allocation7], 4
          %s281 = int_to_ptr.vmem [resolvable:$true] %s280
          %286 = dma.hbm_to_vmem [thread:$0]  %s3, 2048, %s281, [#allocation6], 128, 128, 8
        $region24: #{tpu_custom_call.1} parent=11 // pred_fallthru
          _
        // Predicated region
        $region25: #{tpu_custom_call.1} parent=11 // pred_check
          %p287 = pneg %p133
        $region26: #{tpu_custom_call.1} parent=11 // pred_check_branch
          %289 = sbr.rel (%p287) target = $region28
        $region27: #{tpu_custom_call.1} parent=11 // pred_region
          _
        $region28: #{tpu_custom_call.1} parent=11 // pred_fallthru
          _
        // Predicated region
        $region29: #{tpu_custom_call.1} parent=11 // pred_check
          %p290 = pneg %p154
        $region30: #{tpu_custom_call.1} parent=11 // pred_check_branch
          %292 = sbr.rel (%p290) target = $region32
        $region31: #{tpu_custom_call.1} parent=11 // pred_region
          %s294 = ssub.s32 2048, 2048
          %295 = vsyncadd [#allocation9], %s294
          %s296 = sshll.u32 [#allocation8], 4
          %s297 = int_to_ptr.vmem [resolvable:$true] %s296
          %302 = dma.hbm_to_vmem [thread:$0]  %s5, 2048, %s297, [#allocation9], 128, 128, 8
        $region32: #{tpu_custom_call.1} parent=11 // pred_fallthru
          _
        // Predicated region
        $region33: #{tpu_custom_call.1} parent=11 // pred_check
          %p303 = pneg %p175
        $region34: #{tpu_custom_call.1} parent=11 // pred_check_branch
          %305 = sbr.rel (%p303) target = $region36
        $region35: #{tpu_custom_call.1} parent=11 // pred_region
          _
        $region36: #{tpu_custom_call.1} parent=11 // pred_fallthru
          _
        // Predicated region
        $region37: #{tpu_custom_call.1} parent=11 // pred_check
          %p306 = pneg %p196
        $region38: #{tpu_custom_call.1} parent=11 // pred_check_branch
          %308 = sbr.rel (%p306) target = $region40
        $region39: #{tpu_custom_call.1} parent=11 // pred_region
          %s310 = ssub.s32 2048, 2048
          %311 = vsyncadd [#allocation9], %s310
          %s312 = sshll.u32 [#allocation10], 4
          %s313 = int_to_ptr.vmem [resolvable:$true] %s312
          %318 = dma.hbm_to_vmem [thread:$0]  %s7, 2048, %s313, [#allocation9], 128, 128, 8
        $region40: #{tpu_custom_call.1} parent=11 // pred_fallthru
          _
        // Predicated region
        $region41: #{tpu_custom_call.1} parent=11 // pred_check
          %p319 = pneg %p217
        $region42: #{tpu_custom_call.1} parent=11 // pred_check_branch
          %321 = sbr.rel (%p319) target = $region44
        $region43: #{tpu_custom_call.1} parent=11 // pred_region
          _
        $region44: #{tpu_custom_call.1} parent=11 // pred_fallthru
          _
      $region12: #{tpu_custom_call.1} parent=5 // pred_fallthru
        _
      %p322 = scmp.lt.s32.totalorder %s23, 2
      // Predicated region
      $region45: #{tpu_custom_call.1} parent=5 // pred_check
        %p323 = pneg %p322
      $region46: #{tpu_custom_call.1} parent=5 // pred_check_branch
        %325 = sbr.rel (%p323) target = $region48
      $region47: #{tpu_custom_call.1} parent=5 // pred_region
        // Predicated region
        $region49: #{tpu_custom_call.1} parent=47 // pred_check
          %p326 = pneg %p43
        $region50: #{tpu_custom_call.1} parent=47 // pred_check_branch
          %328 = sbr.rel (%p326) target = $region52
        $region51: #{tpu_custom_call.1} parent=47 // pred_region
          %s329 = sand.u32 %s33, 1
          %s330 = scalar_lea.sflag [#allocation3], %s329
          %s331 = sand.u32 %s33, 1
          %s332 = smul.addr %s331, 8
          %s333 = scalar_lea.vmem [#allocation2], %s332
          %s335 = ssub.s32 128, 128
          %336 = vsyncadd %s330, %s335
          %s337 = smul.addr %s23, 128
          %s338 = scalar_lea.hbm %s0, %s337
          %s340 = sshll.u32 %s333, 4
          %s341 = int_to_ptr.vmem [resolvable:$true] %s340
          %343 = dma.hbm_to_vmem [thread:$0]  %s338, 128, %s341, %s330
        $region52: #{tpu_custom_call.1} parent=47 // pred_fallthru
          _
      $region48: #{tpu_custom_call.1} parent=5 // pred_fallthru
        _
      %p344 = scmp.le.s32.totalorder 1, %s23
      %p345 = scmp.lt.s32.totalorder %s23, 3
      %p346 = pnand %p344, %p345
      %p347 = pneg %p346
      // Predicated region
      $region53: #{tpu_custom_call.1} parent=5 // pred_check
        _
      $region54: #{tpu_custom_call.1} parent=5 // pred_check_branch
        %349 = sbr.rel (%p346) target = $region56
      $region55: #{tpu_custom_call.1} parent=5 // pred_region
        %s350 = ssub.s32 %s23, 1
        %s351 = sand.u32 %s36, 1
        %s352 = scalar_lea.sflag [#allocation3], %s351
        %s353 = sand.u32 %s36, 1
        %s354 = smul.addr %s353, 8
        %s355 = scalar_lea.vmem [#allocation2], %s354
        // Predicated region
        $region57: #{tpu_custom_call.1} parent=55 // pred_check
          %p356 = pneg %p49
        $region58: #{tpu_custom_call.1} parent=55 // pred_check_branch
          %358 = sbr.rel (%p356) target = $region60
        $region59: #{tpu_custom_call.1} parent=55 // pred_region
          %359 = dma.done %s352, 128
        $region60: #{tpu_custom_call.1} parent=55 // pred_fallthru
          _
        // Predicated region
        $region61: #{tpu_custom_call.1} parent=55 // pred_check
          %p360 = pneg %p70
        $region62: #{tpu_custom_call.1} parent=55 // pred_check_branch
          %362 = sbr.rel (%p360) target = $region64
        $region63: #{tpu_custom_call.1} parent=55 // pred_region
          %363 = dma.done [#allocation6], 2048
        $region64: #{tpu_custom_call.1} parent=55 // pred_fallthru
          _
        // Predicated region
        $region65: #{tpu_custom_call.1} parent=55 // pred_check
          %p364 = pneg %p112
        $region66: #{tpu_custom_call.1} parent=55 // pred_check_branch
          %366 = sbr.rel (%p364) target = $region68
        $region67: #{tpu_custom_call.1} parent=55 // pred_region
          %367 = dma.done [#allocation6], 2048
        $region68: #{tpu_custom_call.1} parent=55 // pred_fallthru
          _
        // Predicated region
        $region69: #{tpu_custom_call.1} parent=55 // pred_check
          %p368 = pneg %p154
        $region70: #{tpu_custom_call.1} parent=55 // pred_check_branch
          %370 = sbr.rel (%p368) target = $region72
        $region71: #{tpu_custom_call.1} parent=55 // pred_region
          %371 = dma.done [#allocation9], 2048
        $region72: #{tpu_custom_call.1} parent=55 // pred_fallthru
          _
        // Predicated region
        $region73: #{tpu_custom_call.1} parent=55 // pred_check
          %p372 = pneg %p196
        $region74: #{tpu_custom_call.1} parent=55 // pred_check_branch
          %374 = sbr.rel (%p372) target = $region76
        $region75: #{tpu_custom_call.1} parent=55 // pred_region
          %375 = dma.done [#allocation9], 2048
        $region76: #{tpu_custom_call.1} parent=55 // pred_fallthru
          _
        %s376 = sand.u32 %s36, 1
        %s377 = scalar_lea.sflag [#allocation3], %s376
        %s378 = sand.u32 %s36, 1
        %s379 = smul.addr %s378, 8
        %s380 = scalar_lea.vmem [#allocation2], %s379
        %p381 = pneg %p49
        %p382 = pneg %p46
        %p383 = pneg %p70
        %p384 = pneg %p67
        %p385 = pneg %p91
        %p386 = pneg %p88
        %p387 = pneg %p112
        %p388 = pneg %p109
        %p389 = pneg %p133
        %p390 = pneg %p130
        %p391 = pneg %p154
        %p392 = pneg %p151
        %p393 = pneg %p175
        %p394 = pneg %p172
        %p395 = pneg %p196
        %p396 = pneg %p193
        %p397 = pneg %p217
        %p398 = pneg %p214
        %p399 = pneg %p243
        %p400 = pneg %p240
        %s401 = sand.u32 %s230, 1
        %s402 = scalar_lea.sflag [#allocation4], %s401
        %s403 = sand.u32 %s230, 1
        %s404 = smul.addr %s403, 8
        %s405 = scalar_lea.vmem [#allocation11], %s404
        %v406 = vld [vmem:[%s355] sm:$0xff]
        %v407 = vld [vmem:[#allocation5] sm:$0xff]
        %v408 = vld [vmem:[#allocation5 + $0x8] sm:$0xff]
        %v409 = vld [vmem:[#allocation5 + $0x10] sm:$0xff]
        %v410 = vld [vmem:[#allocation5 + $0x18] sm:$0xff]
        %v411 = vld [vmem:[#allocation5 + $0x20] sm:$0xff]
        %v412 = vld [vmem:[#allocation5 + $0x28] sm:$0xff]
        %v413 = vld [vmem:[#allocation5 + $0x30] sm:$0xff]
        %v414 = vld [vmem:[#allocation5 + $0x38] sm:$0xff]
        %v415 = vld [vmem:[#allocation5 + $0x40] sm:$0xff]
        %v416 = vld [vmem:[#allocation5 + $0x48] sm:$0xff]
        %v417 = vld [vmem:[#allocation5 + $0x50] sm:$0xff]
        %v418 = vld [vmem:[#allocation5 + $0x58] sm:$0xff]
        %v419 = vld [vmem:[#allocation5 + $0x60] sm:$0xff]
        %v420 = vld [vmem:[#allocation5 + $0x68] sm:$0xff]
        %v421 = vld [vmem:[#allocation5 + $0x70] sm:$0xff]
        %v422 = vld [vmem:[#allocation5 + $0x78] sm:$0xff]
        %v423 = vld [vmem:[%s2] sm:$0x1]
        %v425 = vlaneseq
        %v426 = vshrl.u32 %v425, 7
        %v427 = vsub.s32 0, %v426
        %v428 = vrot.slane %v423, %v427
        %430 = vmatprep.subr.mxu0 0.0
        %431 = vmatpush1.msra.mxu0 %v407
        %432 = vmatprep.subr.mxu0 0.0
        %433 = vmatpush1.msra.mxu0 %v408
        %434 = vmatprep.subr.mxu0 0.0
        %435 = vmatpush1.msra.mxu0 %v409
        %436 = vmatprep.subr.mxu0 0.0
        %437 = vmatpush1.msra.mxu0 %v410
        %438 = vmatprep.subr.mxu0 0.0
        %439 = vmatpush1.msra.mxu0 %v411
        %440 = vmatprep.subr.mxu0 0.0
        %441 = vmatpush1.msra.mxu0 %v412
        %442 = vmatprep.subr.mxu0 0.0
        %443 = vmatpush1.msra.mxu0 %v413
        %444 = vmatprep.subr.mxu0 0.0
        %445 = vmatpush1.msra.mxu0 %v414
        %446 = vmatprep.subr.mxu0 0.0
        %447 = vmatpush1.msra.mxu0 %v415
        %448 = vmatprep.subr.mxu0 0.0
        %449 = vmatpush1.msra.mxu0 %v416
        %450 = vmatprep.subr.mxu0 0.0
        %451 = vmatpush1.msra.mxu0 %v417
        %452 = vmatprep.subr.mxu0 0.0
        %453 = vmatpush1.msra.mxu0 %v418
        %454 = vmatprep.subr.mxu0 0.0
        %455 = vmatpush1.msra.mxu0 %v419
        %456 = vmatprep.subr.mxu0 0.0
        %457 = vmatpush1.msra.mxu0 %v420
        %458 = vmatprep.subr.mxu0 0.0
        %459 = vmatpush1.msra.mxu0 %v421
        %460 = vmatprep.subr.mxu0 0.0
        %461 = vmatpush1.msra.mxu0 %v422
        %462 = vmatprep.subr.mxu0 0.0
        %463 = vmatpush1.msra.mxu0 0.0
        %464 = vmatprep.subr.mxu0 0.0
        %465 = vmatpush1.msra.mxu0 0.0
        %466 = vmatprep.subr.mxu0 0.0
        %467 = vmatpush1.msra.mxu0 0.0
        %468 = vmatprep.subr.mxu0 0.0
        %469 = vmatpush1.msra.mxu0 0.0
        %470 = vmatprep.subr.mxu0 0.0
        %471 = vmatpush1.msra.mxu0 0.0
        %472 = vmatprep.subr.mxu0 0.0
        %473 = vmatpush1.msra.mxu0 0.0
        %474 = vmatprep.subr.mxu0 0.0
        %475 = vmatpush1.msra.mxu0 0.0
        %476 = vmatprep.subr.mxu0 0.0
        %477 = vmatpush1.msra.mxu0 0.0
        %478 = vmatprep.subr.mxu0 0.0
        %479 = vmatpush1.msra.mxu0 0.0
        %480 = vmatprep.subr.mxu0 0.0
        %481 = vmatpush1.msra.mxu0 0.0
        %482 = vmatprep.subr.mxu0 0.0
        %483 = vmatpush1.msra.mxu0 0.0
        %484 = vmatprep.subr.mxu0 0.0
        %485 = vmatpush1.msra.mxu0 0.0
        %486 = vmatprep.subr.mxu0 0.0
        %487 = vmatpush1.msra.mxu0 0.0
        %488 = vmatprep.subr.mxu0 0.0
        %489 = vmatpush1.msra.mxu0 0.0
        %490 = vmatprep.subr.mxu0 0.0
        %491 = vmatpush1.msra.mxu0 0.0
        %492 = vmatprep.subr.mxu0 0.0
        %493 = vmatpush1.msra.mxu0 0.0
        %494 = vmatprep.mubr.f32.mxu0 0.0
        %495 = vmatmul.mubr.f32.gmra.mrb[0].mxu0 %v406
        %v496 = vpop.f32.mrb[0].mxu0
        %v497 = vadd.f32 %v428, %v496
        %v498 = vpop.f32.mrb[0].mxu0
        %499 = vdwg.mxu0
        %vm500 = vcmp.ge.f32.partialorder %v497, 0.0
        %v501 = vmul.f32 %v497, 0.2
        %v502 = vsel %vm500, %v497, %v501
        %v503 = vld [vmem:[#allocation7] sm:$0xff]
        %v504 = vld [vmem:[#allocation7 + $0x8] sm:$0xff]
        %v505 = vld [vmem:[#allocation7 + $0x10] sm:$0xff]
        %v506 = vld [vmem:[#allocation7 + $0x18] sm:$0xff]
        %v507 = vld [vmem:[#allocation7 + $0x20] sm:$0xff]
        %v508 = vld [vmem:[#allocation7 + $0x28] sm:$0xff]
        %v509 = vld [vmem:[#allocation7 + $0x30] sm:$0xff]
        %v510 = vld [vmem:[#allocation7 + $0x38] sm:$0xff]
        %v511 = vld [vmem:[#allocation7 + $0x40] sm:$0xff]
        %v512 = vld [vmem:[#allocation7 + $0x48] sm:$0xff]
        %v513 = vld [vmem:[#allocation7 + $0x50] sm:$0xff]
        %v514 = vld [vmem:[#allocation7 + $0x58] sm:$0xff]
        %v515 = vld [vmem:[#allocation7 + $0x60] sm:$0xff]
        %v516 = vld [vmem:[#allocation7 + $0x68] sm:$0xff]
        %v517 = vld [vmem:[#allocation7 + $0x70] sm:$0xff]
        %v518 = vld [vmem:[#allocation7 + $0x78] sm:$0xff]
        %v519 = vld [vmem:[%s4] sm:$0x1]
        %v521 = vlaneseq
        %v522 = vshrl.u32 %v521, 7
        %v523 = vsub.s32 0, %v522
        %v524 = vrot.slane %v519, %v523
        %526 = vmatprep.subr.mxu0 0.0
        %527 = vmatpush1.msra.mxu0 %v503
        %528 = vmatprep.subr.mxu0 0.0
        %529 = vmatpush1.msra.mxu0 %v504
        %530 = vmatprep.subr.mxu0 0.0
        %531 = vmatpush1.msra.mxu0 %v505
        %532 = vmatprep.subr.mxu0 0.0
        %533 = vmatpush1.msra.mxu0 %v506
        %534 = vmatprep.subr.mxu0 0.0
        %535 = vmatpush1.msra.mxu0 %v507
        %536 = vmatprep.subr.mxu0 0.0
        %537 = vmatpush1.msra.mxu0 %v508
        %538 = vmatprep.subr.mxu0 0.0
        %539 = vmatpush1.msra.mxu0 %v509
        %540 = vmatprep.subr.mxu0 0.0
        %541 = vmatpush1.msra.mxu0 %v510
        %542 = vmatprep.subr.mxu0 0.0
        %543 = vmatpush1.msra.mxu0 %v511
        %544 = vmatprep.subr.mxu0 0.0
        %545 = vmatpush1.msra.mxu0 %v512
        %546 = vmatprep.subr.mxu0 0.0
        %547 = vmatpush1.msra.mxu0 %v513
        %548 = vmatprep.subr.mxu0 0.0
        %549 = vmatpush1.msra.mxu0 %v514
        %550 = vmatprep.subr.mxu0 0.0
        %551 = vmatpush1.msra.mxu0 %v515
        %552 = vmatprep.subr.mxu0 0.0
        %553 = vmatpush1.msra.mxu0 %v516
        %554 = vmatprep.subr.mxu0 0.0
        %555 = vmatpush1.msra.mxu0 %v517
        %556 = vmatprep.subr.mxu0 0.0
        %557 = vmatpush1.msra.mxu0 %v518
        %558 = vmatprep.subr.mxu0 0.0
        %559 = vmatpush1.msra.mxu0 0.0
        %560 = vmatprep.subr.mxu0 0.0
        %561 = vmatpush1.msra.mxu0 0.0
        %562 = vmatprep.subr.mxu0 0.0
        %563 = vmatpush1.msra.mxu0 0.0
        %564 = vmatprep.subr.mxu0 0.0
        %565 = vmatpush1.msra.mxu0 0.0
        %566 = vmatprep.subr.mxu0 0.0
        %567 = vmatpush1.msra.mxu0 0.0
        %568 = vmatprep.subr.mxu0 0.0
        %569 = vmatpush1.msra.mxu0 0.0
        %570 = vmatprep.subr.mxu0 0.0
        %571 = vmatpush1.msra.mxu0 0.0
        %572 = vmatprep.subr.mxu0 0.0
        %573 = vmatpush1.msra.mxu0 0.0
        %574 = vmatprep.subr.mxu0 0.0
        %575 = vmatpush1.msra.mxu0 0.0
        %576 = vmatprep.subr.mxu0 0.0
        %577 = vmatpush1.msra.mxu0 0.0
        %578 = vmatprep.subr.mxu0 0.0
        %579 = vmatpush1.msra.mxu0 0.0
        %580 = vmatprep.subr.mxu0 0.0
        %581 = vmatpush1.msra.mxu0 0.0
        %582 = vmatprep.subr.mxu0 0.0
        %583 = vmatpush1.msra.mxu0 0.0
        %584 = vmatprep.subr.mxu0 0.0
        %585 = vmatpush1.msra.mxu0 0.0
        %586 = vmatprep.subr.mxu0 0.0
        %587 = vmatpush1.msra.mxu0 0.0
        %588 = vmatprep.subr.mxu0 0.0
        %589 = vmatpush1.msra.mxu0 0.0
        %590 = vmatprep.mubr.f32.mxu0 0.0
        %591 = vmatmul.mubr.f32.gmra.mrb[0].mxu0 %v502
        %v592 = vpop.f32.mrb[0].mxu0
        %v593 = vadd.f32 %v524, %v592
        %v594 = vpop.f32.mrb[0].mxu0
        %595 = vdwg.mxu0
        %vm596 = vcmp.ge.f32.partialorder %v593, 0.0
        %v597 = vmul.f32 %v593, 0.2
        %v598 = vsel %vm596, %v593, %v597
        %v599 = vld [vmem:[#allocation8] sm:$0xff]
        %v600 = vld [vmem:[#allocation8 + $0x8] sm:$0xff]
        %v601 = vld [vmem:[#allocation8 + $0x10] sm:$0xff]
        %v602 = vld [vmem:[#allocation8 + $0x18] sm:$0xff]
        %v603 = vld [vmem:[#allocation8 + $0x20] sm:$0xff]
        %v604 = vld [vmem:[#allocation8 + $0x28] sm:$0xff]
        %v605 = vld [vmem:[#allocation8 + $0x30] sm:$0xff]
        %v606 = vld [vmem:[#allocation8 + $0x38] sm:$0xff]
        %v607 = vld [vmem:[#allocation8 + $0x40] sm:$0xff]
        %v608 = vld [vmem:[#allocation8 + $0x48] sm:$0xff]
        %v609 = vld [vmem:[#allocation8 + $0x50] sm:$0xff]
        %v610 = vld [vmem:[#allocation8 + $0x58] sm:$0xff]
        %v611 = vld [vmem:[#allocation8 + $0x60] sm:$0xff]
        %v612 = vld [vmem:[#allocation8 + $0x68] sm:$0xff]
        %v613 = vld [vmem:[#allocation8 + $0x70] sm:$0xff]
        %v614 = vld [vmem:[#allocation8 + $0x78] sm:$0xff]
        %v615 = vld [vmem:[%s6] sm:$0x1]
        %v617 = vlaneseq
        %v618 = vshrl.u32 %v617, 7
        %v619 = vsub.s32 0, %v618
        %v620 = vrot.slane %v615, %v619
        %622 = vmatprep.subr.mxu0 0.0
        %623 = vmatpush1.msra.mxu0 %v599
        %624 = vmatprep.subr.mxu0 0.0
        %625 = vmatpush1.msra.mxu0 %v600
        %626 = vmatprep.subr.mxu0 0.0
        %627 = vmatpush1.msra.mxu0 %v601
        %628 = vmatprep.subr.mxu0 0.0
        %629 = vmatpush1.msra.mxu0 %v602
        %630 = vmatprep.subr.mxu0 0.0
        %631 = vmatpush1.msra.mxu0 %v603
        %632 = vmatprep.subr.mxu0 0.0
        %633 = vmatpush1.msra.mxu0 %v604
        %634 = vmatprep.subr.mxu0 0.0
        %635 = vmatpush1.msra.mxu0 %v605
        %636 = vmatprep.subr.mxu0 0.0
        %637 = vmatpush1.msra.mxu0 %v606
        %638 = vmatprep.subr.mxu0 0.0
        %639 = vmatpush1.msra.mxu0 %v607
        %640 = vmatprep.subr.mxu0 0.0
        %641 = vmatpush1.msra.mxu0 %v608
        %642 = vmatprep.subr.mxu0 0.0
        %643 = vmatpush1.msra.mxu0 %v609
        %644 = vmatprep.subr.mxu0 0.0
        %645 = vmatpush1.msra.mxu0 %v610
        %646 = vmatprep.subr.mxu0 0.0
        %647 = vmatpush1.msra.mxu0 %v611
        %648 = vmatprep.subr.mxu0 0.0
        %649 = vmatpush1.msra.mxu0 %v612
        %650 = vmatprep.subr.mxu0 0.0
        %651 = vmatpush1.msra.mxu0 %v613
        %652 = vmatprep.subr.mxu0 0.0
        %653 = vmatpush1.msra.mxu0 %v614
        %654 = vmatprep.subr.mxu0 0.0
        %655 = vmatpush1.msra.mxu0 0.0
        %656 = vmatprep.subr.mxu0 0.0
        %657 = vmatpush1.msra.mxu0 0.0
        %658 = vmatprep.subr.mxu0 0.0
        %659 = vmatpush1.msra.mxu0 0.0
        %660 = vmatprep.subr.mxu0 0.0
        %661 = vmatpush1.msra.mxu0 0.0
        %662 = vmatprep.subr.mxu0 0.0
        %663 = vmatpush1.msra.mxu0 0.0
        %664 = vmatprep.subr.mxu0 0.0
        %665 = vmatpush1.msra.mxu0 0.0
        %666 = vmatprep.subr.mxu0 0.0
        %667 = vmatpush1.msra.mxu0 0.0
        %668 = vmatprep.subr.mxu0 0.0
        %669 = vmatpush1.msra.mxu0 0.0
        %670 = vmatprep.subr.mxu0 0.0
        %671 = vmatpush1.msra.mxu0 0.0
        %672 = vmatprep.subr.mxu0 0.0
        %673 = vmatpush1.msra.mxu0 0.0
        %674 = vmatprep.subr.mxu0 0.0
        %675 = vmatpush1.msra.mxu0 0.0
        %676 = vmatprep.subr.mxu0 0.0
        %677 = vmatpush1.msra.mxu0 0.0
        %678 = vmatprep.subr.mxu0 0.0
        %679 = vmatpush1.msra.mxu0 0.0
        %680 = vmatprep.subr.mxu0 0.0
        %681 = vmatpush1.msra.mxu0 0.0
        %682 = vmatprep.subr.mxu0 0.0
        %683 = vmatpush1.msra.mxu0 0.0
        %684 = vmatprep.subr.mxu0 0.0
        %685 = vmatpush1.msra.mxu0 0.0
        %686 = vmatprep.mubr.f32.mxu0 0.0
        %687 = vmatmul.mubr.f32.gmra.mrb[0].mxu0 %v598
        %v688 = vpop.f32.mrb[0].mxu0
        %v689 = vadd.f32 %v620, %v688
        %v690 = vpop.f32.mrb[0].mxu0
        %691 = vdwg.mxu0
        %vm692 = vcmp.ge.f32.partialorder %v689, 0.0
        %v693 = vmul.f32 %v689, 0.2
        %v694 = vsel %vm692, %v689, %v693
        %v695 = vld [vmem:[#allocation10] sm:$0xff]
        %v696 = vld [vmem:[#allocation10 + $0x8] sm:$0xff]
        %v697 = vld [vmem:[#allocation10 + $0x10] sm:$0xff]
        %v698 = vld [vmem:[#allocation10 + $0x18] sm:$0xff]
        %v699 = vld [vmem:[#allocation10 + $0x20] sm:$0xff]
        %v700 = vld [vmem:[#allocation10 + $0x28] sm:$0xff]
        %v701 = vld [vmem:[#allocation10 + $0x30] sm:$0xff]
        %v702 = vld [vmem:[#allocation10 + $0x38] sm:$0xff]
        %v703 = vld [vmem:[#allocation10 + $0x40] sm:$0xff]
        %v704 = vld [vmem:[#allocation10 + $0x48] sm:$0xff]
        %v705 = vld [vmem:[#allocation10 + $0x50] sm:$0xff]
        %v706 = vld [vmem:[#allocation10 + $0x58] sm:$0xff]
        %v707 = vld [vmem:[#allocation10 + $0x60] sm:$0xff]
        %v708 = vld [vmem:[#allocation10 + $0x68] sm:$0xff]
        %v709 = vld [vmem:[#allocation10 + $0x70] sm:$0xff]
        %v710 = vld [vmem:[#allocation10 + $0x78] sm:$0xff]
        %v711 = vld [vmem:[%s8] sm:$0x1]
        %v713 = vlaneseq
        %v714 = vshrl.u32 %v713, 7
        %v715 = vsub.s32 0, %v714
        %v716 = vrot.slane %v711, %v715
        %718 = vmatprep.subr.mxu0 0.0
        %719 = vmatpush1.msra.mxu0 %v695
        %720 = vmatprep.subr.mxu0 0.0
        %721 = vmatpush1.msra.mxu0 %v696
        %722 = vmatprep.subr.mxu0 0.0
        %723 = vmatpush1.msra.mxu0 %v697
        %724 = vmatprep.subr.mxu0 0.0
        %725 = vmatpush1.msra.mxu0 %v698
        %726 = vmatprep.subr.mxu0 0.0
        %727 = vmatpush1.msra.mxu0 %v699
        %728 = vmatprep.subr.mxu0 0.0
        %729 = vmatpush1.msra.mxu0 %v700
        %730 = vmatprep.subr.mxu0 0.0
        %731 = vmatpush1.msra.mxu0 %v701
        %732 = vmatprep.subr.mxu0 0.0
        %733 = vmatpush1.msra.mxu0 %v702
        %734 = vmatprep.subr.mxu0 0.0
        %735 = vmatpush1.msra.mxu0 %v703
        %736 = vmatprep.subr.mxu0 0.0
        %737 = vmatpush1.msra.mxu0 %v704
        %738 = vmatprep.subr.mxu0 0.0
        %739 = vmatpush1.msra.mxu0 %v705
        %740 = vmatprep.subr.mxu0 0.0
        %741 = vmatpush1.msra.mxu0 %v706
        %742 = vmatprep.subr.mxu0 0.0
        %743 = vmatpush1.msra.mxu0 %v707
        %744 = vmatprep.subr.mxu0 0.0
        %745 = vmatpush1.msra.mxu0 %v708
        %746 = vmatprep.subr.mxu0 0.0
        %747 = vmatpush1.msra.mxu0 %v709
        %748 = vmatprep.subr.mxu0 0.0
        %749 = vmatpush1.msra.mxu0 %v710
        %750 = vmatprep.subr.mxu0 0.0
        %751 = vmatpush1.msra.mxu0 0.0
        %752 = vmatprep.subr.mxu0 0.0
        %753 = vmatpush1.msra.mxu0 0.0
        %754 = vmatprep.subr.mxu0 0.0
        %755 = vmatpush1.msra.mxu0 0.0
        %756 = vmatprep.subr.mxu0 0.0
        %757 = vmatpush1.msra.mxu0 0.0
        %758 = vmatprep.subr.mxu0 0.0
        %759 = vmatpush1.msra.mxu0 0.0
        %760 = vmatprep.subr.mxu0 0.0
        %761 = vmatpush1.msra.mxu0 0.0
        %762 = vmatprep.subr.mxu0 0.0
        %763 = vmatpush1.msra.mxu0 0.0
        %764 = vmatprep.subr.mxu0 0.0
        %765 = vmatpush1.msra.mxu0 0.0
        %766 = vmatprep.subr.mxu0 0.0
        %767 = vmatpush1.msra.mxu0 0.0
        %768 = vmatprep.subr.mxu0 0.0
        %769 = vmatpush1.msra.mxu0 0.0
        %770 = vmatprep.subr.mxu0 0.0
        %771 = vmatpush1.msra.mxu0 0.0
        %772 = vmatprep.subr.mxu0 0.0
        %773 = vmatpush1.msra.mxu0 0.0
        %774 = vmatprep.subr.mxu0 0.0
        %775 = vmatpush1.msra.mxu0 0.0
        %776 = vmatprep.subr.mxu0 0.0
        %777 = vmatpush1.msra.mxu0 0.0
        %778 = vmatprep.subr.mxu0 0.0
        %779 = vmatpush1.msra.mxu0 0.0
        %780 = vmatprep.subr.mxu0 0.0
        %781 = vmatpush1.msra.mxu0 0.0
        %782 = vmatprep.mubr.f32.mxu0 0.0
        %783 = vmatmul.mubr.f32.gmra.mrb[0].mxu0 %v694
        %v784 = vpop.f32.mrb[0].mxu0
        %v785 = vadd.f32 %v716, %v784
        %v786 = vpop.f32.mrb[0].mxu0
        %787 = vdwg.mxu0
        %788 = vst [vmem:[%s405] sm:$0xff] %v785
        %s789 = sand.u32 %s230, 1
        %s790 = scalar_lea.sflag [#allocation4], %s789
        %s791 = sand.u32 %s230, 1
        %s792 = smul.addr %s791, 8
        %s793 = scalar_lea.vmem [#allocation11], %s792
        // Predicated region
        $region77: #{tpu_custom_call.1} parent=55 // pred_check
          %p794 = pneg %p240
        $region78: #{tpu_custom_call.1} parent=55 // pred_check_branch
          %796 = sbr.rel (%p794) target = $region80
        $region79: #{tpu_custom_call.1} parent=55 // pred_region
          %s798 = ssub.s32 128, 128
          %799 = vsyncadd %s790, %s798
          %s800 = smul.addr %s28, 128
          %s801 = scalar_lea.hbm %s9, %s800
          %s803 = sshll.u32 %s793, 4
          %s804 = int_to_ptr.vmem [resolvable:$true] %s803
          %806 = dma.vmem_to_hbm [thread:$0]  %s804, 128, %s801, %s790
        $region80: #{tpu_custom_call.1} parent=55 // pred_fallthru
          _
      $region56: #{tpu_custom_call.1} parent=5 // pred_fallthru
        _
      %p807 = scmp.le.s32.totalorder 2, %s23
      // Predicated region
      $region81: #{tpu_custom_call.1} parent=5 // pred_check
        %p808 = pneg %p807
      $region82: #{tpu_custom_call.1} parent=5 // pred_check_branch
        %810 = sbr.rel (%p808) target = $region84
      $region83: #{tpu_custom_call.1} parent=5 // pred_region
        %s811 = ssub.s32 %s23, 2
        // Predicated region
        $region85: #{tpu_custom_call.1} parent=83 // pred_check
          %p812 = pneg %p246
        $region86: #{tpu_custom_call.1} parent=83 // pred_check_branch
          %814 = sbr.rel (%p812) target = $region88
        $region87: #{tpu_custom_call.1} parent=83 // pred_region
          %s815 = sand.u32 %s231, 1
          %s816 = scalar_lea.sflag [#allocation4], %s815
          %s817 = sand.u32 %s231, 1
          %s818 = smul.addr %s817, 8
          %s819 = scalar_lea.vmem [#allocation11], %s818
          %820 = dma.done %s816, 128
        $region88: #{tpu_custom_call.1} parent=83 // pred_fallthru
          _
      $region84: #{tpu_custom_call.1} parent=5 // pred_fallthru
        _
    $region6: #{tpu_custom_call.1} parent=1 // loop_footer
      %s27 = sadd.s32 1, %s23
    $region7: #{tpu_custom_call.1} parent=1 // loop_footer_branch
      %22 = sbr.rel target = $region3
    $region8: #{tpu_custom_call.1} parent=1 // loop_exit
      _
    %821 = vsyncpa [#allocation3], 1
    %s822 = scalar_lea.sflag [#allocation3], 1
    %823 = vsyncpa %s822, 1
    %824 = vsyncpa [#allocation6], 1
    %825 = vsyncpa [#allocation9], 1
    %826 = vsyncpa [#allocation4], 1
    %s827 = scalar_lea.sflag [#allocation4], 1
    %828 = vsyncpa %s827, 1

</llo_original>
